<compile_context>
chip_gen: v5e
topology: v5e:2x2
jax: 0.10.0
libtpu: 0.0.40
codegen_flags: <defaults>
</compile_context>

<pallas_src>
import jax
import jax.numpy as jnp
from jax.experimental import pallas as pl
from jax.experimental.pallas import tpu as pltpu


IN_FEATURES = 18
OUT_FEATURES = 7

_LANE = 128                      # lane granule
_TB_MAX = 32768                  # max lane tile: 2.25 MiB x + 0.875 MiB y (f32)
_TB_MIN = 512                    # keep per-step DMA well above fixed overhead
_PALLAS_MIN_ROWS = 4096          # below this, fused XLA beats a pallas_call
_VMEM_LIMIT = 32 * 1024 * 1024   # explicit scoped-VMEM (v5e default is 16 MiB)


def _cdiv(a, b):
    return -(-a // b)


def _round_up(n, m):
    return ((n + m - 1) // m) * m


def _pick_tile(b_pad):
    """Lane tile: multiple of 128, <= _TB_MAX, and >= 2 grid tiles whenever
    there is enough work (v7x megacore).  Padding stays decoupled from tb."""
    n_tiles = max(1, _cdiv(b_pad, _TB_MAX))
    if n_tiles == 1 and b_pad >= 2 * _TB_MIN:
        n_tiles = 2                            # give both v7x TensorCores work
    tb = _round_up(_cdiv(b_pad, n_tiles), _LANE)
    return int(max(_LANE, min(tb, _TB_MAX)))


def _baseline_kernel(w_ref, b_ref, x_ref, o_ref):
    # w_ref: (7, 18) f32   b_ref: (7, 1) f32
    # x_ref: (18, TB) f32  o_ref: (7, TB) f32
    # bf16 operands -> single MXU pass regardless of ambient matmul precision;
    # accumulation stays f32 via preferred_element_type.
    w = w_ref[...].astype(jnp.bfloat16)
    x = x_ref[...].astype(jnp.bfloat16)
    y = jnp.dot(w, x, preferred_element_type=jnp.float32)
    o_ref[...] = jnp.tanh(y + b_ref[...]).astype(o_ref.dtype)


def baseline_forward_fm(x_fm, weight, bias):
    """Feature-major fast path: x_fm (18, B) -> (7, B) = tanh(W @ x_fm + b).

    Lane-dense, zero layout plumbing around the pallas_call.
    weight: (7, 18) f32 (PyTorch layout, used directly), bias: (7,) f32.
    """
    k, B = x_fm.shape
    assert k == IN_FEATURES

    # Pad only to the lane granule (not to a tile multiple); usually a no-op.
    B_pad = _round_up(B, _LANE)
    if B_pad != B:
        x_fm = jnp.pad(x_fm, ((0, 0), (0, B_pad - B)))

    tb = _pick_tile(B_pad)
    grid = pl.cdiv(B_pad, tb)          # ragged last tile handled by clamped DMA
    b2d = bias.reshape(OUT_FEATURES, 1)

    cost = pl.CostEstimate(
        flops=2 * B_pad * IN_FEATURES * OUT_FEATURES,
        transcendentals=B_pad * OUT_FEATURES,
        bytes_accessed=4 * (B_pad * (IN_FEATURES + OUT_FEATURES)
                            + IN_FEATURES * OUT_FEATURES + OUT_FEATURES),
    )

    out_fm = pl.pallas_call(
        _baseline_kernel,
        out_shape=jax.ShapeDtypeStruct((OUT_FEATURES, B_pad), jnp.float32),
        grid_spec=pltpu.PrefetchScalarGridSpec(
            num_scalar_prefetch=0,
            grid=(grid,),
            in_specs=[
                # Weight & bias: full arrays, constant index_map -> resident.
                pl.BlockSpec((OUT_FEATURES, IN_FEATURES), lambda i: (0, 0)),
                pl.BlockSpec((OUT_FEATURES, 1), lambda i: (0, 0)),
                # x: lane-dense tiles of the batch axis.
                pl.BlockSpec((IN_FEATURES, tb), lambda i: (0, i)),
            ],
            out_specs=pl.BlockSpec((OUT_FEATURES, tb), lambda i: (0, i)),
        ),
        compiler_params=pltpu.CompilerParams(
            dimension_semantics=("parallel",),
            vmem_limit_bytes=_VMEM_LIMIT,
        ),
        cost_estimate=cost,
    )(weight, b2d, x_fm)

    return out_fm if B_pad == B else out_fm[:, :B]


def baseline_forward(x, weight, bias, *, use_pallas=None):
    """PyTorch-layout entry: x (B, 18) -> (B, 7) = tanh(x @ W.T + b).

    Batch-major callers are served by the fused XLA expression below
    (no pad/transpose plumbing around the kernel, and a single-tile
    pallas_call would lose to it anyway at small B).  Producers that can emit
    feature-major activations should call `baseline_forward_fm` directly.
    """
    B = x.shape[0]
    if use_pallas is None:
        use_pallas = B >= _PALLAS_MIN_ROWS
    if not use_pallas:
        return jnp.tanh(x @ weight.T + bias)
    # TODO(synk): ideal callers hand us (18, B) directly; these two transposes
    # re-read/write x and y once each and exist only for interface parity.
    return baseline_forward_fm(x.T, weight, bias).T


def init_params(key):
    """Deterministic init matching nn.Linear(18, 7) default (U(+-1/sqrt(in)))."""
    k_w, k_b = jax.random.split(key)
    bound = 1.0 / jnp.sqrt(jnp.float32(IN_FEATURES))
    weight = jax.random.uniform(
        k_w, (OUT_FEATURES, IN_FEATURES), jnp.float32, -bound, bound)
    bias = jax.random.uniform(
        k_b, (OUT_FEATURES,), jnp.float32, -bound, bound)
    return weight, bias


if __name__ == "__main__":
    key = jax.random.PRNGKey(0)
    k_params, k_x = jax.random.split(key)
    weight, bias = init_params(k_params)

    # --- Feature-major (lane-dense) Pallas kernel path -----------------------
    B = 1024                                   # -> tb=512, grid=2 (both v7x TCs)
    x_fm = jax.random.normal(k_x, (IN_FEATURES, B), jnp.float32)
    fwd_fm = jax.jit(baseline_forward_fm)
    out_fm = jax.block_until_ready(fwd_fm(x_fm, weight, bias))
    ref_fm = jnp.tanh(weight @ x_fm + bias[:, None])
    assert out_fm.shape == (OUT_FEATURES, B)
    assert jnp.allclose(out_fm, ref_fm, atol=2e-2, rtol=0.0), \
        float(jnp.max(jnp.abs(out_fm - ref_fm)))

    # --- PyTorch-layout entry, small batch (fused XLA path) ------------------
    x_small = jax.random.normal(jax.random.PRNGKey(1), (8, IN_FEATURES),
                                jnp.float32)
    out_small = jax.block_until_ready(
        jax.jit(baseline_forward)(x_small, weight, bias))
    ref_small = jnp.tanh(x_small @ weight.T + bias)
    assert out_small.shape == (8, OUT_FEATURES)
    assert jnp.allclose(out_small, ref_small, atol=1e-5, rtol=1e-5)

    # --- PyTorch-layout entry, forced through the Pallas kernel --------------
    fwd_bm = jax.jit(baseline_forward, static_argnames=("use_pallas",))
    out_bm = jax.block_until_ready(
        fwd_bm(x_fm.T, weight, bias, use_pallas=True))
    assert out_bm.shape == (B, OUT_FEATURES)
    assert jnp.allclose(out_bm, ref_fm.T, atol=2e-2, rtol=0.0)

    print("KERNEL_OK")
</pallas_src>

<mosaic_0001>
module attributes {stable_mosaic.version = 11 : i64} {
  func.func @_baseline_kernel(%arg0: i32, %arg1: memref<7x18xf32, #tpu.memory_space<vmem>>, %arg2: memref<7x1xf32, #tpu.memory_space<vmem>>, %arg3: memref<18x512xf32, #tpu.memory_space<vmem>>, %arg4: memref<7x512xf32, #tpu.memory_space<vmem>>) attributes {dimension_semantics = [#tpu.dimension_semantics<parallel>], iteration_bounds = array<i64: 2>, scalar_prefetch = 0 : i64, scratch_operands = 0 : i64, tpu.core_type = #tpu.core_type<tc>, window_params = [{pipeline_mode = #tpu.pipeline_mode<synchronous>, transform_indices = @transform_0, window_bounds = array<i64: 7, 18>}, {pipeline_mode = #tpu.pipeline_mode<synchronous>, transform_indices = @transform_1, window_bounds = array<i64: 7, 1>}, {transform_indices = @transform_2, window_bounds = array<i64: 18, 512>}, {transform_indices = @transform_3, window_bounds = array<i64: 7, 512>}]} {
    %c0 = arith.constant 0 : index
    %c0_0 = arith.constant 0 : index
    %0 = vector.load %arg1[%c0, %c0_0] : memref<7x18xf32, #tpu.memory_space<vmem>>, vector<7x18xf32>
    %1 = arith.truncf %0 : vector<7x18xf32> to vector<7x18xbf16>
    %c0_1 = arith.constant 0 : index
    %c0_2 = arith.constant 0 : index
    %2 = vector.load %arg3[%c0_1, %c0_2] : memref<18x512xf32, #tpu.memory_space<vmem>>, vector<18x512xf32>
    %3 = arith.truncf %2 : vector<18x512xf32> to vector<18x512xbf16>
    %cst = arith.constant dense<0.000000e+00> : vector<7x512xf32>
    %4 = tpu.matmul %1, %3, %cst {dimension_numbers = #tpu.dot_dimension_numbers<[1], [0], [0], [1], [0, 0, 1, 1], [], []>} : vector<7x18xbf16>, vector<18x512xbf16>, vector<7x512xf32> -> vector<7x512xf32>
    %c0_3 = arith.constant 0 : index
    %c0_4 = arith.constant 0 : index
    %5 = vector.load %arg2[%c0_3, %c0_4] : memref<7x1xf32, #tpu.memory_space<vmem>>, vector<7x1xf32>
    %6 = vector.broadcast %5 : vector<7x1xf32> to vector<7x512xf32>
    %7 = arith.addf %4, %6 : vector<7x512xf32>
    %8 = math.tanh %7 : vector<7x512xf32>
    %c0_5 = arith.constant 0 : index
    %c0_6 = arith.constant 0 : index
    %9 = vector.load %arg4[%c0_5, %c0_6] : memref<7x512xf32, #tpu.memory_space<vmem>>, vector<7x512xf32>
    tpu.vector_store %arg4[%c0_5, %c0_6], %8 {strides = array<i32>} : memref<7x512xf32, #tpu.memory_space<vmem>>, vector<7x512xf32>,
    return
  }
  func.func @transform_0(%arg0: i32) -> (i32, i32) {
    %c0_i32 = arith.constant 0 : i32
    %c0_i32_0 = arith.constant 0 : i32
    %c0_i32_1 = arith.constant 0 : i32
    return %c0_i32, %c0_i32_0 : i32, i32
  }
  func.func @transform_1(%arg0: i32) -> (i32, i32) {
    %c0_i32 = arith.constant 0 : i32
    %c0_i32_0 = arith.constant 0 : i32
    %c0_i32_1 = arith.constant 0 : i32
    return %c0_i32, %c0_i32_0 : i32, i32
  }
  func.func @transform_2(%arg0: i32) -> (i32, i32) {
    %c0_i32 = arith.constant 0 : i32
    %c0_i32_0 = arith.constant 0 : i32
    return %c0_i32, %arg0 : i32, i32
  }
  func.func @transform_3(%arg0: i32) -> (i32, i32) {
    %c0_i32 = arith.constant 0 : i32
    %c0_i32_0 = arith.constant 0 : i32
    return %c0_i32, %arg0 : i32, i32
  }
}

</mosaic_0001>

<llo_original>
// kernel: baseline_forward_fm.1
$region0: #{baseline_forward_fm.1}
  #allocation0 [shape = 'u32[]', space=smem, size = 0x4, offset = 0x4, fixed_abs, tag = 'smem constant byte address 0x4 - core index']
  #allocation1 [shape = 'u32[72,128]{1,0:T(1,128)}', space=vmem, size = 0x9000, scoped, tag = 'internal scratch']
  %s0 = inlined_call_operand.vmem [shape: f32[7,18], index: 0, kind: input, shape index: {}]
  %s1 = inlined_call_operand.vmem [shape: f32[7,1], index: 1, kind: input, shape index: {}]
  %s2 = inlined_call_operand.hbm [shape: f32[18,1024], index: 2, kind: input, shape index: {}]
  %s3 = inlined_call_operand.hbm [shape: f32[7,1024], index: 3, kind: output, shape index: {}]
  %s4 = sld [smem:[#allocation0]]
  $region49: #{baseline_forward_fm.1} parent=0
    _
  %s6 = ssub.s32 1, %s4
  %s7 = scalar_select 0, %s6, %s4
  $region1: #{baseline_forward_fm.1} parent=0
    #allocation2 [shape = 'u8[98304]{0}', space=vmem, size = 0x18000, scoped, tag = 'input window, operand 2']
    #allocation3 [shape = 's32[2]{0}', space=sflag, size = 0x8, scoped, tag = 'scoped memory for baseline_forward_fm.1']
    #allocation4 [shape = 's32[2]{0}', space=sflag, size = 0x8, scoped, tag = 'scoped memory for baseline_forward_fm.1']
    #allocation5 [shape = 'u8[32768]{0}', space=vmem, size = 0x8000, scoped, tag = 'output window, operand 0']
    %8 = vsyncpa [#allocation3], 0
    %s9 = scalar_lea.sflag [#allocation3], 1
    %10 = vsyncpa %s9, 0
    %11 = vsyncpa [#allocation4], 0
    %s12 = scalar_lea.sflag [#allocation4], 1
    %13 = vsyncpa %s12, 0
    loop: start=0, step=1, limit=4
    $region2: #{baseline_forward_fm.1} parent=1 // loop_pre_header
      _
    $region3: #{baseline_forward_fm.1} parent=1 // loop_header
      %s15 = sphi 0, %s19
      %p16 = scmp.ge.s32.totalorder %s15, 4
      %s23 = sphi 0, %s23
      %s25 = sphi 0, %s23
      %s26 = sphi 0, %s25
      %s40 = sphi 0, %s26
      %s44 = sphi 0, %s44
      %s46 = sphi 0, %s44
      %s47 = sphi 0, %s46
      %s61 = sphi 0, %s47
      %s67 = sphi 0, %s69
      %s70 = sphi 0, %s67
      %s71 = sphi 0, %s70
      %s87 = sphi 0, %s71
      %s93 = sphi 0, %s95
      %s96 = sphi 0, %s93
      %s97 = sphi 0, %s96
      %s113 = sphi 0, %s97
    $region4: #{baseline_forward_fm.1} parent=1 // loop_header_branch
      %18 = sbr.rel (%p16) target = $region8
    $region5: #{baseline_forward_fm.1} parent=1 // loop_body
      %s20 = ssub.s32 %s15, 1
      %s21 = ssub.s32 %s15, 2
      %s22 = sadd.s32 %s15, 1
      %s24 = sadd.s32 %s23, 1
      %p27 = scmp.eq.s32.totalorder %s15, 1
      %p28 = scmp.ne.s32.totalorder %s23, %s25
      %p29 = scmp.eq.s32.totalorder %s15, 0
      %p30 = por %p28, %p29
      %p31 = scmp.ne.s32.totalorder %s23, %s25
      %p32 = scmp.eq.s32.totalorder %s20, 1
      %p33 = por %p31, %p32
      %p34 = scmp.ne.s32.totalorder %s25, %s26
      %p35 = scmp.eq.s32.totalorder %s20, 0
      %p36 = por %p34, %p35
      %p37 = scmp.ne.s32.totalorder %s25, %s26
      %p38 = scmp.eq.s32.totalorder %s21, 1
      %p39 = por %p37, %p38
      %p41 = scmp.ne.s32.totalorder %s26, %s40
      %p42 = scmp.eq.s32.totalorder %s21, 0
      %p43 = por %p41, %p42
      %s45 = sadd.s32 %s44, 1
      %p48 = scmp.eq.s32.totalorder %s15, 1
      %p49 = scmp.ne.s32.totalorder %s44, %s46
      %p50 = scmp.eq.s32.totalorder %s15, 0
      %p51 = por %p49, %p50
      %p52 = scmp.ne.s32.totalorder %s44, %s46
      %p53 = scmp.eq.s32.totalorder %s20, 1
      %p54 = por %p52, %p53
      %p55 = scmp.ne.s32.totalorder %s46, %s47
      %p56 = scmp.eq.s32.totalorder %s20, 0
      %p57 = por %p55, %p56
      %p58 = scmp.ne.s32.totalorder %s46, %s47
      %p59 = scmp.eq.s32.totalorder %s21, 1
      %p60 = por %p58, %p59
      %p62 = scmp.ne.s32.totalorder %s47, %s61
      %p63 = scmp.eq.s32.totalorder %s21, 0
      %p64 = por %p62, %p63
      %s65 = ssub.s32 %s15, %s22
      %p66 = scmp.eq.s32.totalorder %s65, 0
      %s68 = sadd.s32 %s67, 1
      %s69 = scalar_select %p66, %s67, %s68
      %p72 = pneg %p66
      %p73 = scmp.eq.s32.totalorder %s15, 1
      %p74 = por %p72, %p73
      %p75 = scmp.ne.s32.totalorder %s67, %s70
      %p76 = scmp.eq.s32.totalorder %s15, 0
      %p77 = por %p75, %p76
      %p78 = scmp.ne.s32.totalorder %s67, %s70
      %p79 = scmp.eq.s32.totalorder %s20, 1
      %p80 = por %p78, %p79
      %p81 = scmp.ne.s32.totalorder %s70, %s71
      %p82 = scmp.eq.s32.totalorder %s20, 0
      %p83 = por %p81, %p82
      %p84 = scmp.ne.s32.totalorder %s70, %s71
      %p85 = scmp.eq.s32.totalorder %s21, 1
      %p86 = por %p84, %p85
      %p88 = scmp.ne.s32.totalorder %s71, %s87
      %p89 = scmp.eq.s32.totalorder %s21, 0
      %p90 = por %p88, %p89
      %s91 = ssub.s32 %s15, %s22
      %p92 = scmp.eq.s32.totalorder %s91, 0
      %s94 = sadd.s32 %s93, 1
      %s95 = scalar_select %p92, %s93, %s94
      %p98 = pneg %p92
      %p99 = scmp.eq.s32.totalorder %s15, 1
      %p100 = por %p98, %p99
      %p101 = scmp.ne.s32.totalorder %s93, %s96
      %p102 = scmp.eq.s32.totalorder %s15, 0
      %p103 = por %p101, %p102
      %p104 = scmp.ne.s32.totalorder %s93, %s96
      %p105 = scmp.eq.s32.totalorder %s20, 1
      %p106 = por %p104, %p105
      %p107 = scmp.ne.s32.totalorder %s96, %s97
      %p108 = scmp.eq.s32.totalorder %s20, 0
      %p109 = por %p107, %p108
      %p110 = scmp.ne.s32.totalorder %s96, %s97
      %p111 = scmp.eq.s32.totalorder %s21, 1
      %p112 = por %p110, %p111
      %p114 = scmp.ne.s32.totalorder %s97, %s113
      %p115 = scmp.eq.s32.totalorder %s21, 0
      %p116 = por %p114, %p115
      %p117 = scmp.le.s32.totalorder 1, %s15
      %p118 = scmp.lt.s32.totalorder %s15, 3
      %p119 = pnand %p117, %p118
      %p120 = pneg %p119
      // Predicated region
      $region9: #{baseline_forward_fm.1} parent=5 // pred_check
        _
      $region10: #{baseline_forward_fm.1} parent=5 // pred_check_branch
        %122 = sbr.rel (%p119) target = $region12
      $region11: #{baseline_forward_fm.1} parent=5 // pred_region
        %s123 = ssub.s32 %s15, 1
        // Predicated region
        $region13: #{baseline_forward_fm.1} parent=11 // pred_check
          %p124 = pneg %p36
        $region14: #{baseline_forward_fm.1} parent=11 // pred_check_branch
          %126 = sbr.rel (%p124) target = $region16
        $region15: #{baseline_forward_fm.1} parent=11 // pred_region
          _
        $region16: #{baseline_forward_fm.1} parent=11 // pred_fallthru
          _
        // Predicated region
        $region17: #{baseline_forward_fm.1} parent=11 // pred_check
          %p127 = pneg %p57
        $region18: #{baseline_forward_fm.1} parent=11 // pred_check_branch
          %129 = sbr.rel (%p127) target = $region20
        $region19: #{baseline_forward_fm.1} parent=11 // pred_region
          _
        $region20: #{baseline_forward_fm.1} parent=11 // pred_fallthru
          _
      $region12: #{baseline_forward_fm.1} parent=5 // pred_fallthru
        _
      %p130 = scmp.lt.s32.totalorder %s15, 2
      // Predicated region
      $region21: #{baseline_forward_fm.1} parent=5 // pred_check
        %p131 = pneg %p130
      $region22: #{baseline_forward_fm.1} parent=5 // pred_check_branch
        %133 = sbr.rel (%p131) target = $region24
      $region23: #{baseline_forward_fm.1} parent=5 // pred_region
        // Predicated region
        $region25: #{baseline_forward_fm.1} parent=23 // pred_check
          %p134 = pneg %p77
        $region26: #{baseline_forward_fm.1} parent=23 // pred_check_branch
          %136 = sbr.rel (%p134) target = $region28
        $region27: #{baseline_forward_fm.1} parent=23 // pred_region
          %s137 = sand.u32 %s67, 1
          %s138 = scalar_lea.sflag [#allocation3], %s137
          %s139 = sand.u32 %s67, 1
          %s140 = smul.addr %s139, 96
          %s141 = scalar_lea.vmem [#allocation2], %s140
          %s142 = smul.u32 4, %s15
          %144 = vsyncadd %s138, 0
          %s145 = smul.addr %s142, 8
          %s146 = scalar_lea.hbm %s2, %s145
          %s147 = sshll.u32 %s146, 4
          %s148 = int_to_ptr.hbm [resolvable:$true] %s147
          %s149 = sshll.u32 %s141, 4
          %s150 = int_to_ptr.vmem [resolvable:$true] %s149
          %155 = dma.hbm_to_vmem [thread:$0]  %s148, 1536, %s150, %s138, 1024, 512, 32
        $region28: #{baseline_forward_fm.1} parent=23 // pred_fallthru
          _
      $region24: #{baseline_forward_fm.1} parent=5 // pred_fallthru
        _
      %p156 = scmp.le.s32.totalorder 1, %s15
      %p157 = scmp.lt.s32.totalorder %s15, 3
      %p158 = pnand %p156, %p157
      %p159 = pneg %p158
      // Predicated region
      $region29: #{baseline_forward_fm.1} parent=5 // pred_check
        _
      $region30: #{baseline_forward_fm.1} parent=5 // pred_check_branch
        %161 = sbr.rel (%p158) target = $region32
      $region31: #{baseline_forward_fm.1} parent=5 // pred_region
        %s162 = ssub.s32 %s15, 1
        %s163 = sand.u32 %s70, 1
        %s164 = scalar_lea.sflag [#allocation3], %s163
        %s165 = sand.u32 %s70, 1
        %s166 = smul.addr %s165, 96
        %s167 = scalar_lea.vmem [#allocation2], %s166
        // Predicated region
        $region33: #{baseline_forward_fm.1} parent=31 // pred_check
          %p168 = pneg %p83
        $region34: #{baseline_forward_fm.1} parent=31 // pred_check_branch
          %170 = sbr.rel (%p168) target = $region36
        $region35: #{baseline_forward_fm.1} parent=31 // pred_region
          %172 = dma.done %s164, 1536
        $region36: #{baseline_forward_fm.1} parent=31 // pred_fallthru
          _
        %p173 = pneg %p36
        %p174 = pneg %p33
        %p175 = pneg %p57
        %p176 = pneg %p54
        %s177 = sand.u32 %s70, 1
        %s178 = scalar_lea.sflag [#allocation3], %s177
        %s179 = sand.u32 %s70, 1
        %s180 = smul.addr %s179, 96
        %s181 = scalar_lea.vmem [#allocation2], %s180
        %p182 = pneg %p83
        %p183 = pneg %p80
        %p184 = pneg %p109
        %p185 = pneg %p106
        %s186 = sand.u32 %s96, 1
        %s187 = scalar_lea.sflag [#allocation4], %s186
        %s188 = sand.u32 %s96, 1
        %s189 = smul.addr %s188, 32
        %s190 = scalar_lea.vmem [#allocation5], %s189
        %s191 = smul.u32 4, %s20
        %s192 = smul.u32 4, %s20
        %v194 = vld [vmem:[%s0] sm:$0x7f]
        %v195 = vpack.c.bf16 %v194, %v194
        %v196 = vld [vmem:[%s167] sm:$0xff]
        %v197 = vld [vmem:[%s167 + $0x8] sm:$0xff]
        %v198 = vld [vmem:[%s167 + $0x10] sm:$0xff]
        %v199 = vld [vmem:[%s167 + $0x18] sm:$0xff]
        %v200 = vld [vmem:[%s167 + $0x20] sm:$0xff]
        %v201 = vld [vmem:[%s167 + $0x28] sm:$0xff]
        %v202 = vld [vmem:[%s167 + $0x30] sm:$0xff]
        %v203 = vld [vmem:[%s167 + $0x38] sm:$0xff]
        %v204 = vld [vmem:[%s167 + $0x40] sm:$0x3]
        %v205 = vld [vmem:[%s167 + $0x48] sm:$0x3]
        %v206 = vld [vmem:[%s167 + $0x50] sm:$0x3]
        %v207 = vld [vmem:[%s167 + $0x58] sm:$0x3]
        %v208 = vpack.c.bf16 %v200, %v196
        %v209 = vpack.c.bf16 %v201, %v197
        %v210 = vpack.c.bf16 %v202, %v198
        %v211 = vpack.c.bf16 %v203, %v199
        %v212 = vpack.c.bf16 %v204, %v204
        %v213 = vpack.c.bf16 %v205, %v205
        %v214 = vpack.c.bf16 %v206, %v206
        %v215 = vpack.c.bf16 %v207, %v207
        %v216 = vld [vmem:[%s1] sm:$0x7f]
        %218 = vset.pattern.permute.xlu0 0
        %219 = vperm.xlu0 %218, %v216
        %v220 = vpop.permute.xlu0 %219
        %vm222 = vcmask 146432
        %v224 = vsel %vm222, %v195, 0
        %vm226 = vcmask 1040384
        %v228 = vsel %vm226, %v212, 0
        %v231 = vsel %vm226, %v213, 0
        %v234 = vsel %vm226, %v214, 0
        %v237 = vsel %vm226, %v215, 0
        %239 = vmatpush.bf16.msra.mxu0 0
        %240 = vmatpush.bf16.msra.mxu0 0
        %241 = vmatpush.bf16.msra.mxu0 0
        %242 = vmatpush.bf16.msra.mxu0 0
        %243 = vmatpush.bf16.msra.mxu0 0
        %244 = vmatpush.bf16.msra.mxu0 0
        %245 = vmatpush.bf16.msra.mxu0 %v228
        %246 = vmatpush.bf16.msra.mxu0 %v208
        %247 = vmatmul.bf16.gmra.mxu0 %v224
        %v248 = vpop.f32.mrf.mxu0
        %v249 = vadd.f32 %v220, %v248
        %v250 = vpop.f32.mrf.mxu0
        %251 = vdwg.mxu0
        %252 = vmatpush.bf16.msra.mxu0 0
        %253 = vmatpush.bf16.msra.mxu0 0
        %254 = vmatpush.bf16.msra.mxu0 0
        %255 = vmatpush.bf16.msra.mxu0 0
        %256 = vmatpush.bf16.msra.mxu0 0
        %257 = vmatpush.bf16.msra.mxu0 0
        %258 = vmatpush.bf16.msra.mxu0 %v231
        %259 = vmatpush.bf16.msra.mxu0 %v209
        %260 = vmatmul.bf16.gmra.mxu0 %v224
        %v261 = vpop.f32.mrf.mxu0
        %v262 = vadd.f32 %v220, %v261
        %v263 = vpop.f32.mrf.mxu0
        %264 = vdwg.mxu0
        %265 = vmatpush.bf16.msra.mxu0 0
        %266 = vmatpush.bf16.msra.mxu0 0
        %267 = vmatpush.bf16.msra.mxu0 0
        %268 = vmatpush.bf16.msra.mxu0 0
        %269 = vmatpush.bf16.msra.mxu0 0
        %270 = vmatpush.bf16.msra.mxu0 0
        %271 = vmatpush.bf16.msra.mxu0 %v234
        %272 = vmatpush.bf16.msra.mxu0 %v210
        %273 = vmatmul.bf16.gmra.mxu0 %v224
        %v274 = vpop.f32.mrf.mxu0
        %v275 = vadd.f32 %v220, %v274
        %v276 = vpop.f32.mrf.mxu0
        %277 = vdwg.mxu0
        %278 = vmatpush.bf16.msra.mxu0 0
        %279 = vmatpush.bf16.msra.mxu0 0
        %280 = vmatpush.bf16.msra.mxu0 0
        %281 = vmatpush.bf16.msra.mxu0 0
        %282 = vmatpush.bf16.msra.mxu0 0
        %283 = vmatpush.bf16.msra.mxu0 0
        %284 = vmatpush.bf16.msra.mxu0 %v237
        %285 = vmatpush.bf16.msra.mxu0 %v211
        %286 = vmatmul.bf16.gmra.mxu0 %v224
        %v287 = vpop.f32.mrf.mxu0
        %v288 = vadd.f32 %v220, %v287
        %v289 = vpop.f32.mrf.mxu0
        %290 = vdwg.mxu0
        %v291 = vtanh.pop %v249
        %v292 = vtanh.pop %v262
        %v293 = vtanh.pop %v275
        %v294 = vtanh.pop %v288
        %295 = vst [vmem:[%s190] sm:$0x7f] %v291
        %296 = vst [vmem:[%s190 + $0x8] sm:$0x7f] %v292
        %297 = vst [vmem:[%s190 + $0x10] sm:$0x7f] %v293
        %298 = vst [vmem:[%s190 + $0x18] sm:$0x7f] %v294
        %s299 = sand.u32 %s96, 1
        %s300 = scalar_lea.sflag [#allocation4], %s299
        %s301 = sand.u32 %s96, 1
        %s302 = smul.addr %s301, 32
        %s303 = scalar_lea.vmem [#allocation5], %s302
        // Predicated region
        $region37: #{baseline_forward_fm.1} parent=31 // pred_check
          %p304 = pneg %p106
        $region38: #{baseline_forward_fm.1} parent=31 // pred_check_branch
          %306 = sbr.rel (%p304) target = $region40
        $region39: #{baseline_forward_fm.1} parent=31 // pred_region
          %s307 = smul.u32 4, %s20
          %309 = vsyncadd %s300, 0
          %s310 = smul.addr %s307, 8
          %s311 = scalar_lea.hbm %s3, %s310
          %s313 = sshll.u32 %s303, 4
          %s314 = int_to_ptr.vmem [resolvable:$true] %s313
          %s315 = sshll.u32 %s311, 4
          %s316 = int_to_ptr.hbm [resolvable:$true] %s315
          %318 = dma.vmem_to_hbm [thread:$0]  %s314, 512, %s316, %s300
        $region40: #{baseline_forward_fm.1} parent=31 // pred_fallthru
          _
      $region32: #{baseline_forward_fm.1} parent=5 // pred_fallthru
        _
      %p319 = scmp.le.s32.totalorder 2, %s15
      // Predicated region
      $region41: #{baseline_forward_fm.1} parent=5 // pred_check
        %p320 = pneg %p319
      $region42: #{baseline_forward_fm.1} parent=5 // pred_check_branch
        %322 = sbr.rel (%p320) target = $region44
      $region43: #{baseline_forward_fm.1} parent=5 // pred_region
        %s323 = ssub.s32 %s15, 2
        // Predicated region
        $region45: #{baseline_forward_fm.1} parent=43 // pred_check
          %p324 = pneg %p112
        $region46: #{baseline_forward_fm.1} parent=43 // pred_check_branch
          %326 = sbr.rel (%p324) target = $region48
        $region47: #{baseline_forward_fm.1} parent=43 // pred_region
          %s327 = sand.u32 %s97, 1
          %s328 = scalar_lea.sflag [#allocation4], %s327
          %s329 = sand.u32 %s97, 1
          %s330 = smul.addr %s329, 32
          %s331 = scalar_lea.vmem [#allocation5], %s330
          %333 = dma.done %s328, 512
        $region48: #{baseline_forward_fm.1} parent=43 // pred_fallthru
          _
      $region44: #{baseline_forward_fm.1} parent=5 // pred_fallthru
        _
    $region6: #{baseline_forward_fm.1} parent=1 // loop_footer
      %s19 = sadd.s32 1, %s15
    $region7: #{baseline_forward_fm.1} parent=1 // loop_footer_branch
      %14 = sbr.rel target = $region3
    $region8: #{baseline_forward_fm.1} parent=1 // loop_exit
      _
    %334 = vsyncpa [#allocation3], 1
    %s335 = scalar_lea.sflag [#allocation3], 1
    %336 = vsyncpa %s335, 1
    %337 = vsyncpa [#allocation4], 1
    %s338 = scalar_lea.sflag [#allocation4], 1
    %339 = vsyncpa %s338, 1

</llo_original>
